<compile_context>
chip_gen: v6e
topology: v6e:2x2x1
jax: 0.10.0
libtpu: 0.0.40
codegen_flags: <defaults>
</compile_context>

<pallas_src>
import functools

import numpy as np
import jax
import jax.numpy as jnp
from jax.experimental import pallas as pl
from jax.experimental.pallas import tpu as pltpu


def _round_up(x: int, m: int) -> int:
    return ((x + m - 1) // m) * m


@functools.lru_cache(maxsize=None)
def _tpu_hw():
    """(physical VMEM bytes per core, TensorCores per chip), defensively probed."""
    vmem = 64 * 1024 * 1024   # conservative default (v7x has the smallest VMEM/TC)
    cores = 1                 # conservative default (v5e/v6e are single-TC)
    try:
        info = pltpu.get_tpu_info()
        v = getattr(info, "vmem_capacity_bytes", None)
        if v:
            vmem = int(v)
        for name in ("num_cores", "core_count", "num_tensorcores", "tensorcore_count"):
            c = getattr(info, name, None)
            if c:
                cores = int(c)
                break
    except Exception:
        pass
    return vmem, cores


@functools.lru_cache(maxsize=None)
def _interp_matrix(n_knots: int, forecast_size: int, mode: str) -> np.ndarray:
    """Host-built [K, F] float32 matrix replicating torch F.interpolate (1-D, 1 chan)."""
    dst = np.arange(forecast_size, dtype=np.float64)
    scale = n_knots / forecast_size
    w = np.zeros((n_knots, forecast_size), dtype=np.float32)
    cols = np.arange(forecast_size)
    if mode == "nearest":
        # Legacy PyTorch mode='nearest' (floor), NOT 'nearest-exact'.
        idx = np.minimum(np.floor(dst * scale).astype(np.int64), n_knots - 1)
        w[idx, cols] = 1.0
    elif mode == "linear":
        # align_corners=False (F.interpolate default)
        src = np.maximum((dst + 0.5) * scale - 0.5, 0.0)
        x0 = np.minimum(np.floor(src).astype(np.int64), n_knots - 1)
        x1 = np.minimum(x0 + 1, n_knots - 1)
        lam = np.clip(src - x0, 0.0, 1.0).astype(np.float32)
        np.add.at(w, (x0, cols), (1.0 - lam).astype(np.float32))
        np.add.at(w, (x1, cols), lam)
    else:
        # TODO(synk): 'cubic-<bs>' (bicubic over a [B,1,1,K] tensor) not implemented.
        raise NotImplementedError(f"interpolation_mode={mode!r}")
    return w


def _forecast_kernel(ft_ref, w_ref, fc_ref):
    # [tb, K] @ [K, tf] on the MXU; f32 accumulation.  W stays float32 so the
    # interpolation weights are never quantized for low-precision inputs.
    fc_ref[...] = jnp.dot(
        ft_ref[...].astype(jnp.float32), w_ref[...],
        preferred_element_type=jnp.float32,
    ).astype(fc_ref.dtype)


@functools.partial(jax.jit, static_argnames=("forecast_size", "interpolation_mode"))
def identity_basis(backcast_theta: jnp.ndarray,
                   forecast_theta: jnp.ndarray,
                   *,
                   forecast_size: int,
                   interpolation_mode: str = "linear"):
    # backcast is a pure identity — return the input array, zero extra HBM traffic.
    backcast = backcast_theta

    B, K = forecast_theta.shape
    F = forecast_size
    dtype = forecast_theta.dtype
    itemsize = jnp.dtype(dtype).itemsize
    row_gran = max(8, 32 // itemsize)        # sublane packing: 8 f32 / 16 bf16 / 32 i8

    w = jnp.asarray(_interp_matrix(K, F, interpolation_mode))   # [K, F] f32 constant

    # --- generation-aware VMEM sizing ----------------------------------------
    vmem_phys, num_cores = _tpu_hw()
    tile_budget = int(min(24 << 20, (vmem_phys * 3) // 8))       # ~24 MiB everywhere
    vmem_limit = int(min(vmem_phys // 2, 2 * tile_budget + (8 << 20)))

    # --- F tiling (only when W itself would eat the budget) -------------------
    w_elt = 4  # W is float32
    if 2 * K * F * w_elt <= tile_budget // 2:
        tf = F                                    # common case: one exact-width W block
    else:
        tf = max(128, ((tile_budget // 4) // (K * w_elt)) // 128 * 128)
        tf = min(tf, _round_up(F, 128))
    grid_f = pl.cdiv(F, tf)

    # --- batch tile ------------------------------------------------------------
    w_bytes = 2 * K * tf * w_elt                  # double-buffered, but DMA'd once (invariant map)
    per_row = 2 * (K + tf) * itemsize             # double-buffered input + output rows
    tb_max = max(row_gran,
                 min(4096, ((tile_budget - w_bytes) // per_row) // row_gran * row_gran))

    if B <= tb_max:
        if num_cores >= 2 and grid_f == 1 and B >= 2 * row_gran:
            # two grid steps so both TensorCores (v7x) get work
            tb = _round_up(pl.cdiv(B, 2), row_gran)
        else:
            tb = B                                # single step; block == full dim is legal
    else:
        tb = tb_max
    grid_b = pl.cdiv(B, tb)
    if num_cores >= 2 and grid_b > 1 and (grid_b * grid_f) % 2 == 1:
        # best-effort: even step count so both TensorCores finish together
        tb_alt = max(row_gran, _round_up(pl.cdiv(B, grid_b + 1), row_gran))
        if (pl.cdiv(B, tb_alt) * grid_f) % 2 == 0:
            tb = tb_alt
            grid_b = pl.cdiv(B, tb)

    cost = pl.CostEstimate(
        flops=2 * B * K * F,
        transcendentals=0,
        bytes_accessed=B * K * itemsize + K * F * w_elt + B * F * itemsize)

    forecast = pl.pallas_call(
        _forecast_kernel,
        out_shape=jax.ShapeDtypeStruct((B, F), dtype),           # exact shape: no pad, no slice
        grid=(grid_b, grid_f),
        in_specs=[
            pl.BlockSpec((tb, K), lambda i, j: (i, 0)),
            pl.BlockSpec((K, tf), lambda i, j: (0, j)),          # invariant over batch axis
        ],
        out_specs=pl.BlockSpec((tb, tf), lambda i, j: (i, j)),
        compiler_params=pltpu.CompilerParams(
            dimension_semantics=("parallel", "parallel"),
            vmem_limit_bytes=vmem_limit),
        cost_estimate=cost,
    )(forecast_theta, w)

    return backcast, forecast


if __name__ == "__main__":
    # Module config (IdentityBasis has no learnable params):
    backcast_size = 16
    forecast_size = 8

    B = 8          # batch
    K = 4          # number of knots = forecast_theta feature dim

    key = jax.random.PRNGKey(0)
    k1, k2 = jax.random.split(key)
    backcast_theta = jax.random.normal(k1, (B, backcast_size), dtype=jnp.float32)
    forecast_theta = jax.random.normal(k2, (B, K), dtype=jnp.float32)

    # ---- linear mode -------------------------------------------------------
    backcast, forecast = identity_basis(
        backcast_theta, forecast_theta,
        forecast_size=forecast_size, interpolation_mode="linear")
    jax.block_until_ready((backcast, forecast))

    # Pure-JAX reference (PyTorch linear interp, align_corners=False).
    scale = K / forecast_size
    dst = jnp.arange(forecast_size, dtype=jnp.float32)
    src = jnp.maximum((dst + 0.5) * scale - 0.5, 0.0)
    x0 = jnp.minimum(jnp.floor(src).astype(jnp.int32), K - 1)
    x1 = jnp.minimum(x0 + 1, K - 1)
    lam = jnp.clip(src - x0.astype(jnp.float32), 0.0, 1.0)
    forecast_ref = (forecast_theta[:, x0] * (1.0 - lam)
                    + forecast_theta[:, x1] * lam)

    assert backcast.shape == (B, backcast_size)
    assert forecast.shape == (B, forecast_size)
    assert jnp.allclose(backcast, backcast_theta)
    assert jnp.allclose(forecast, forecast_ref, atol=1e-5, rtol=1e-5)

    # ---- nearest mode (ragged batch: B2 not a multiple of 8) ----------------
    B2 = 10
    ft2 = jax.random.normal(jax.random.PRNGKey(1), (B2, K), dtype=jnp.float32)
    bt2 = jax.random.normal(jax.random.PRNGKey(2), (B2, backcast_size), dtype=jnp.float32)
    _, forecast_nn = identity_basis(
        bt2, ft2, forecast_size=forecast_size, interpolation_mode="nearest")
    jax.block_until_ready(forecast_nn)
    idx_nn = jnp.minimum(jnp.floor(dst * scale).astype(jnp.int32), K - 1)
    forecast_nn_ref = ft2[:, idx_nn]
    assert forecast_nn.shape == (B2, forecast_size)
    assert jnp.allclose(forecast_nn, forecast_nn_ref, atol=1e-5, rtol=1e-5)

    print("KERNEL_OK")
</pallas_src>

<mosaic_0001>
module attributes {stable_mosaic.version = 11 : i64} {
  func.func @_forecast_kernel(%arg0: i32, %arg1: i32, %arg2: memref<8x4xf32, #tpu.memory_space<vmem>>, %arg3: memref<4x8xf32, #tpu.memory_space<vmem>>, %arg4: memref<8x8xf32, #tpu.memory_space<vmem>>) attributes {dimension_semantics = [#tpu.dimension_semantics<parallel>, #tpu.dimension_semantics<parallel>], iteration_bounds = array<i64: 1, 1>, scalar_prefetch = 0 : i64, scratch_operands = 0 : i64, tpu.core_type = #tpu.core_type<tc>, window_params = [{transform_indices = @transform_0, window_bounds = array<i64: 8, 4>}, {transform_indices = @transform_1, window_bounds = array<i64: 4, 8>}, {transform_indices = @transform_2, window_bounds = array<i64: 8, 8>}]} {
    %c0 = arith.constant 0 : index
    %c0_0 = arith.constant 0 : index
    %0 = vector.load %arg2[%c0, %c0_0] : memref<8x4xf32, #tpu.memory_space<vmem>>, vector<8x4xf32>
    %c0_1 = arith.constant 0 : index
    %c0_2 = arith.constant 0 : index
    %1 = vector.load %arg3[%c0_1, %c0_2] : memref<4x8xf32, #tpu.memory_space<vmem>>, vector<4x8xf32>
    %cst = arith.constant dense<0.000000e+00> : vector<8x8xf32>
    %2 = tpu.matmul %0, %1, %cst {dimension_numbers = #tpu.dot_dimension_numbers<[1], [0], [0], [1], [0, 0, 1, 1], [], []>} : vector<8x4xf32>, vector<4x8xf32>, vector<8x8xf32> -> vector<8x8xf32>
    %c0_3 = arith.constant 0 : index
    %c0_4 = arith.constant 0 : index
    %3 = vector.load %arg4[%c0_3, %c0_4] : memref<8x8xf32, #tpu.memory_space<vmem>>, vector<8x8xf32>
    tpu.vector_store %arg4[%c0_3, %c0_4], %2 {strides = array<i32>} : memref<8x8xf32, #tpu.memory_space<vmem>>, vector<8x8xf32>,
    return
  }
  func.func @transform_0(%arg0: i32, %arg1: i32) -> (i32, i32) {
    %c0_i32 = arith.constant 0 : i32
    %c0_i32_0 = arith.constant 0 : i32
    return %arg0, %c0_i32 : i32, i32
  }
  func.func @transform_1(%arg0: i32, %arg1: i32) -> (i32, i32) {
    %c0_i32 = arith.constant 0 : i32
    %c0_i32_0 = arith.constant 0 : i32
    return %c0_i32, %arg1 : i32, i32
  }
  func.func @transform_2(%arg0: i32, %arg1: i32) -> (i32, i32) {
    %c0_i32 = arith.constant 0 : i32
    return %arg0, %arg1 : i32, i32
  }
}

</mosaic_0001>

<llo_original>
// kernel: identity_basis.1
$region0: #{identity_basis.1}
  #allocation0 [shape = 'u32[]', space=smem, size = 0x4, offset = 0x4, fixed_abs, tag = 'smem constant byte address 0x4 - core index']
  #allocation1 [shape = 'u32[144,128]{1,0:T(1,128)}', space=vmem, size = 0x12000, scoped, tag = 'internal scratch']
  %s0 = inlined_call_operand.vmem [shape: f32[8,4], index: 0, kind: input, shape index: {}]
  %s1 = inlined_call_operand.vmem [shape: f32[4,8], index: 1, kind: input, shape index: {}]
  %s2 = inlined_call_operand.hbm [shape: f32[8,8], index: 2, kind: output, shape index: {}]
  %s3 = sld [smem:[#allocation0]]
  $region18: #{identity_basis.1} parent=0
    _
  %s5 = ssub.s32 1, %s3
  %s6 = scalar_select 0, %s5, %s3
  $region1: #{identity_basis.1} parent=0
    #allocation2 [shape = 'u8[4096]{0}', space=vmem, size = 0x1000, scoped, tag = 'output window, operand 0, single buffered']
    #allocation3 [shape = 's32[1]{0}', space=sflag, size = 0x4, scoped, tag = 'scoped memory for identity_basis.1']
    %7 = vsyncpa [#allocation3], 0
    // Predicated region
    $region2: #{identity_basis.1} parent=1 // pred_check
      _
    $region3: #{identity_basis.1} parent=1 // pred_check_branch
      %9 = sbr.rel (0) target = $region5
    $region4: #{identity_basis.1} parent=1 // pred_region
      _
    $region5: #{identity_basis.1} parent=1 // pred_fallthru
      _
    // Predicated region
    $region6: #{identity_basis.1} parent=1 // pred_check
      _
    $region7: #{identity_basis.1} parent=1 // pred_check_branch
      %11 = sbr.rel (0) target = $region9
    $region8: #{identity_basis.1} parent=1 // pred_region
      _
    $region9: #{identity_basis.1} parent=1 // pred_fallthru
      _
    %v12 = vld [vmem:[%s0] sm:$0xff]
    %v13 = vld [vmem:[%s1] sm:$0xf]
    %vm14 = vcmask 31744
    %v16 = vsel %vm14, %v12, 0
    %vm18 = vcmask 1043456
    %v20 = vsel %vm18, %v13, 0
    %22 = vmatprep.subr.mxu0 0.0
    %23 = vmatpush1.msra.mxu0 0.0
    %24 = vmatprep.subr.mxu0 0.0
    %25 = vmatpush1.msra.mxu0 0.0
    %26 = vmatprep.subr.mxu0 0.0
    %27 = vmatpush1.msra.mxu0 0.0
    %28 = vmatprep.subr.mxu0 0.0
    %29 = vmatpush1.msra.mxu0 0.0
    %30 = vmatprep.subr.mxu0 0.0
    %31 = vmatpush1.msra.mxu0 0.0
    %32 = vmatprep.subr.mxu0 0.0
    %33 = vmatpush1.msra.mxu0 0.0
    %34 = vmatprep.subr.mxu0 0.0
    %35 = vmatpush1.msra.mxu0 0.0
    %36 = vmatprep.subr.mxu0 0.0
    %37 = vmatpush1.msra.mxu0 0.0
    %38 = vmatprep.subr.mxu0 0.0
    %39 = vmatpush1.msra.mxu0 0.0
    %40 = vmatprep.subr.mxu0 0.0
    %41 = vmatpush1.msra.mxu0 0.0
    %42 = vmatprep.subr.mxu0 0.0
    %43 = vmatpush1.msra.mxu0 0.0
    %44 = vmatprep.subr.mxu0 0.0
    %45 = vmatpush1.msra.mxu0 0.0
    %46 = vmatprep.subr.mxu0 0.0
    %47 = vmatpush1.msra.mxu0 0.0
    %48 = vmatprep.subr.mxu0 0.0
    %49 = vmatpush1.msra.mxu0 0.0
    %50 = vmatprep.subr.mxu0 0.0
    %51 = vmatpush1.msra.mxu0 0.0
    %52 = vmatprep.subr.mxu0 0.0
    %53 = vmatpush1.msra.mxu0 %v20
    %54 = vmatprep.subr.mxu0 0.0
    %55 = vmatpush2.msra.mxu0 0.0
    %56 = vmatprep.subr.mxu0 0.0
    %57 = vmatpush2.msra.mxu0 0.0
    %58 = vmatprep.subr.mxu0 0.0
    %59 = vmatpush2.msra.mxu0 0.0
    %60 = vmatprep.subr.mxu0 0.0
    %61 = vmatpush2.msra.mxu0 0.0
    %62 = vmatprep.subr.mxu0 0.0
    %63 = vmatpush2.msra.mxu0 0.0
    %64 = vmatprep.subr.mxu0 0.0
    %65 = vmatpush2.msra.mxu0 0.0
    %66 = vmatprep.subr.mxu0 0.0
    %67 = vmatpush2.msra.mxu0 0.0
    %68 = vmatprep.subr.mxu0 0.0
    %69 = vmatpush2.msra.mxu0 0.0
    %70 = vmatprep.subr.mxu0 0.0
    %71 = vmatpush2.msra.mxu0 0.0
    %72 = vmatprep.subr.mxu0 0.0
    %73 = vmatpush2.msra.mxu0 0.0
    %74 = vmatprep.subr.mxu0 0.0
    %75 = vmatpush2.msra.mxu0 0.0
    %76 = vmatprep.subr.mxu0 0.0
    %77 = vmatpush2.msra.mxu0 0.0
    %78 = vmatprep.subr.mxu0 0.0
    %79 = vmatpush2.msra.mxu0 0.0
    %80 = vmatprep.subr.mxu0 0.0
    %81 = vmatpush2.msra.mxu0 0.0
    %82 = vmatprep.subr.mxu0 0.0
    %83 = vmatpush2.msra.mxu0 0.0
    %84 = vmatprep.subr.mxu0 0.0
    %85 = vmatpush2.msra.mxu0 0.0
    %86 = vmatprep.mubr.f32.mxu0 0.0
    %87 = vmatmul.mubr.f32.gmra.mxu0 %v16
    %v88 = vpop.f32.mrf.mxu0
    %v89 = vadd.f32 0.0, %v88
    %v90 = vpop.f32.mrf.mxu0
    %91 = vdwg.mxu0
    %vm92 = vcmask 64512
    %93 = vst.msk [vmem:[#allocation2] sm:$0xff] %vm92, %v89
    // Predicated region
    $region10: #{identity_basis.1} parent=1 // pred_check
      _
    $region11: #{identity_basis.1} parent=1 // pred_check_branch
      %95 = sbr.rel (0) target = $region13
    $region12: #{identity_basis.1} parent=1 // pred_region
      %s97 = ssub.s32 128, 128
      %98 = vsyncadd [#allocation3], %s97
      %s100 = sshll.u32 [#allocation2], 4
      %s101 = int_to_ptr.vmem [resolvable:$true] %s100
      %103 = dma.vmem_to_hbm [thread:$0]  %s101, 128, %s2, [#allocation3]
    $region13: #{identity_basis.1} parent=1 // pred_fallthru
      _
    // Predicated region
    $region14: #{identity_basis.1} parent=1 // pred_check
      _
    $region15: #{identity_basis.1} parent=1 // pred_check_branch
      %105 = sbr.rel (0) target = $region17
    $region16: #{identity_basis.1} parent=1 // pred_region
      %106 = dma.done [#allocation3], 128
    $region17: #{identity_basis.1} parent=1 // pred_fallthru
      _
    %107 = vsyncpa [#allocation3], 1

</llo_original>
